<compile_context>
chip_gen: v7x
topology: tpu7x:2x2x1
jax: 0.10.0
libtpu: 0.0.40
codegen_flags: <defaults>
</compile_context>

<pallas_src>
import math

import jax
import jax.numpy as jnp
from jax.experimental import pallas as pl
from jax.experimental.pallas import tpu as pltpu


def _round_up(x, m):
    return ((x + m - 1) // m) * m


def _tile_and_pad(dim, max_tile):
    """Pick a large tile (multiple of 128) and the padded dim it divides.

    Prefers the largest tile whose zero-padding overhead stays <= 25% of the
    128-aligned dim (never collapse to 128 just because the dim is not
    divisible by 512/1024 -- pad a few extra zero rows instead).
    """
    d = _round_up(max(dim, 1), 128)
    for t in (2048, 1024, 512, 256, 128):
        if t > max_tile or t > d:
            continue
        dpad = _round_up(d, t)
        if dpad - d <= d // 4:
            return t, dpad
    return 128, d


def _agg_vmem_bytes(tm, tk, tn, a_bufs):
    a = a_bufs * tm * tk * 2          # A tiles, bf16
    y = 2 * tk * tn * 2               # Y tiles, bf16
    o = 2 * tm * tn * 4               # out tiles, f32
    acc = tm * tn * 4                 # accumulator scratch, f32
    misc = 2 * (tm + tn) * 4 + (256 << 10)   # dinv/bias buffers + slack
    return a + y + o + acc + misc


# -----------------------------------------------------------------------------
# Kernel 1: row-tiled feature transform   Y_rows = dinv_row * (X2d @ W^T)
#   bf16 operands, f32 accumulate, bf16 pre-scaled output (no extra HBM passes).
# -----------------------------------------------------------------------------
def _xw_kernel(x_ref, w_ref, dinv_ref, o_ref):
    xw = jnp.dot(x_ref[...], w_ref[...], preferred_element_type=jnp.float32)
    o_ref[...] = (xw * dinv_ref[...]).astype(o_ref.dtype)


# -----------------------------------------------------------------------------
# Kernel 2: tiled aggregation   out = dinv * ((A+I) @ Y) + bias
#   A, Y are bf16 tiles; accumulation is f32 in VMEM scratch.
#   grid = (row_tiles, col_tiles, k_tiles); K is last and "arbitrary".
# -----------------------------------------------------------------------------
def _agg_kernel(a_ref, y_ref, dinv_ref, bias_ref, o_ref, acc_ref):
    @pl.when(pl.program_id(2) == 0)
    def _():
        acc_ref[...] = jnp.zeros_like(acc_ref)

    acc_ref[...] += jnp.dot(
        a_ref[...], y_ref[...], preferred_element_type=jnp.float32
    )

    @pl.when(pl.program_id(2) == pl.num_programs(2) - 1)
    def _():
        o_ref[...] = (acc_ref[...] * dinv_ref[...] + bias_ref[...]).astype(o_ref.dtype)


def pyg_gcn_forward(X, edge_index, edge_weight, weight, bias):
    """
    :param X: (B, N, Cin) float32
    :param edge_index: (2, E) int32 COO (row=source, col=target)
    :param edge_weight: (E,) float32
    :param weight: (Cout, Cin) float32   (PyG GCNConv linear weight)
    :param bias: (Cout,) float32
    :return: (B, N, Cout) float32
    """
    B, N, Cin = X.shape
    Cout = weight.shape[0]

    # ---- VMEM budget (generation aware: v7x 64 MiB/TC, v5e/v6e 128 MiB) -----
    try:
        vmem_cap = int(getattr(pltpu.get_tpu_info(), "vmem_capacity_bytes",
                               64 << 20))
    except Exception:
        vmem_cap = 64 << 20
    vmem_limit = max(32 << 20, min(vmem_cap * 3 // 4, 96 << 20))
    tile_budget = int(vmem_limit * 0.85)

    # ---- aggregation tiling --------------------------------------------------
    max_tile = 2048 if tile_budget >= (72 << 20) else 1024
    TMK, Npad = _tile_and_pad(N, max_tile)
    TM = TK = TMK
    Cf = B * Cout
    Cfpad = _round_up(Cf, 128)
    # Triple-buffer A only in the small-Cf (HBM-bound on A) regime, and only
    # when there are enough K steps to pipeline.
    a_bufs = 3 if (Cfpad <= 512 and Npad // TK >= 3) else 2

    # Single column tile (TN = Cfpad) whenever it fits: A (the N^2 operand) is
    # then streamed from HBM exactly once.
    TN = 128
    n128 = Cfpad // 128
    for k in range(n128, 0, -1):
        if n128 % k:
            continue
        if _agg_vmem_bytes(TM, TK, 128 * k, a_bufs) <= tile_budget:
            TN = 128 * k
            break
    while _agg_vmem_bytes(TM, TK, TN, a_bufs) > tile_budget and TK > 128:
        TK //= 2
    while _agg_vmem_bytes(TM, TK, TN, a_bufs) > tile_budget and TM > 128:
        TM //= 2
    # v7x megacore: keep >= 2 programs on the parallel axes so both TCs work.
    if (Npad // TM) * (Cfpad // TN) < 2 and TM >= 256:
        TM //= 2

    # ---- adjacency + normalization scalars (O(E) scatter, built padded) ------
    row, col = edge_index[0], edge_index[1]
    A = jnp.zeros((Npad, Npad), dtype=jnp.float32)
    A = A.at[col, row].add(edge_weight.astype(jnp.float32))
    diag = jnp.arange(N)
    A = A.at[diag, diag].add(1.0)                        # self loops, weight 1
    deg = jnp.sum(A, axis=1)
    dinv = jnp.where(deg > 0.0, 1.0 / jnp.sqrt(deg), 0.0)   # (Npad,) f32
    A_bf = A.astype(jnp.bfloat16)                        # single pad+cast pass

    # ---- Pass 1: Y rows = dinv * (X @ W^T), node-major, bf16 -----------------
    TM1, Mpad1 = _tile_and_pad(Npad * B, 512)
    Xt = jnp.transpose(X, (1, 0, 2)).astype(jnp.float32)          # (N, B, Cin)
    Xt = jnp.pad(Xt, ((0, Npad - N), (0, 0), (0, 0)))             # (Npad, B, Cin)
    X2d = jnp.pad(Xt.reshape(Npad * B, Cin),
                  ((0, Mpad1 - Npad * B), (0, 0))).astype(jnp.bfloat16)
    WT = weight.T.astype(jnp.bfloat16)                            # (Cin, Cout)
    dinv_rows = jnp.pad(jnp.repeat(dinv, B),
                        (0, Mpad1 - Npad * B)).reshape(Mpad1, 1)

    xw = pl.pallas_call(
        _xw_kernel,
        out_shape=jax.ShapeDtypeStruct((Mpad1, Cout), jnp.bfloat16),
        grid_spec=pltpu.PrefetchScalarGridSpec(
            num_scalar_prefetch=0,
            grid=(Mpad1 // TM1,),
            in_specs=[
                pl.BlockSpec((TM1, Cin), lambda i: (i, 0)),
                pl.BlockSpec((Cin, Cout), lambda i: (0, 0)),
                pl.BlockSpec((TM1, 1), lambda i: (i, 0)),
            ],
            out_specs=pl.BlockSpec((TM1, Cout), lambda i: (i, 0)),
        ),
        compiler_params=pltpu.CompilerParams(
            dimension_semantics=("parallel",),
            vmem_limit_bytes=32 * 1024 * 1024,
        ),
    )(X2d, WT, dinv_rows)

    # fold batch into the lane dim: (Npad, B*Cout), already dinv-scaled bf16;
    # one cheap reshape+pad (fused by XLA under jit), no transpose/scale/cast.
    Y = xw[: Npad * B].reshape(Npad, Cf)
    Y = jnp.pad(Y, ((0, 0), (0, Cfpad - Cf)))

    dinv_col = dinv.reshape(Npad, 1)
    bias_f = jnp.pad(jnp.tile(bias.astype(jnp.float32), B),
                     (0, Cfpad - Cf)).reshape(1, Cfpad)

    # A tile spec: triple-buffer in the small-Cf regime (fallback if the
    # pipeline_mode kwarg is unavailable).
    a_imap = lambda i, j, k: (i, k)
    a_spec = pl.BlockSpec((TM, TK), a_imap)
    if a_bufs > 2 and hasattr(pl, "Buffered"):
        try:
            a_spec = pl.BlockSpec((TM, TK), a_imap,
                                  pipeline_mode=pl.Buffered(a_bufs))
        except TypeError:
            a_spec = pl.BlockSpec((TM, TK), a_imap)

    # ---- Pass 2: aggregation (Pallas, tiled over rows/cols/K) ----------------
    out_f = pl.pallas_call(
        _agg_kernel,
        out_shape=jax.ShapeDtypeStruct((Npad, Cfpad), jnp.float32),
        grid_spec=pltpu.PrefetchScalarGridSpec(
            num_scalar_prefetch=0,
            grid=(Npad // TM, Cfpad // TN, Npad // TK),
            in_specs=[
                a_spec,                                            # A tile (bf16)
                pl.BlockSpec((TK, TN), lambda i, j, k: (k, j)),    # Y tile (bf16)
                pl.BlockSpec((TM, 1), lambda i, j, k: (i, 0)),     # dinv rows
                pl.BlockSpec((1, TN), lambda i, j, k: (0, j)),     # folded bias
            ],
            out_specs=pl.BlockSpec((TM, TN), lambda i, j, k: (i, j)),
            scratch_shapes=[pltpu.VMEM((TM, TN), jnp.float32)],
        ),
        compiler_params=pltpu.CompilerParams(
            dimension_semantics=("parallel", "parallel", "arbitrary"),
            vmem_limit_bytes=vmem_limit,
        ),
    )(A_bf, Y, dinv_col, bias_f)

    out = out_f[:N, :Cf].reshape(N, B, Cout)
    return jnp.transpose(out, (1, 0, 2))


# -----------------------------------------------------------------------------
# Deterministic parameter init (GCNConv: glorot weight, zero bias)
# -----------------------------------------------------------------------------
def init_params(key, in_channels, out_channels):
    bound = math.sqrt(6.0 / (in_channels + out_channels))
    weight = jax.random.uniform(
        key, (out_channels, in_channels), dtype=jnp.float32,
        minval=-bound, maxval=bound)
    bias = jnp.zeros((out_channels,), dtype=jnp.float32)
    return weight, bias


if __name__ == "__main__":
    key = jax.random.PRNGKey(0)
    k_x, k_ei, k_ew, k_w = jax.random.split(key, 4)

    B, N, Cin, Cout, E = 2, 16, 8, 16, 40

    X = jax.random.normal(k_x, (B, N, Cin), dtype=jnp.float32)
    edge_index = jax.random.randint(k_ei, (2, E), 0, N, dtype=jnp.int32)
    edge_weight = jax.random.uniform(k_ew, (E,), dtype=jnp.float32)

    weight, bias = init_params(k_w, Cin, Cout)

    fwd = jax.jit(pyg_gcn_forward)
    out = fwd(X, edge_index, edge_weight, weight, bias)
    jax.block_until_ready(out)

    # sanity check against plain-JAX f32 reference (bf16 operands in both
    # kernels -> loosened tolerance; accumulation is f32)
    row, col = edge_index[0], edge_index[1]
    A = jnp.zeros((N, N), jnp.float32).at[col, row].add(edge_weight) + jnp.eye(N)
    deg = A.sum(1)
    dinv = jnp.where(deg > 0, 1.0 / jnp.sqrt(deg), 0.0)
    A_norm = dinv[:, None] * A * dinv[None, :]
    ref = jnp.einsum("ij,bjc->bic", A_norm, X @ weight.T) + bias
    assert out.shape == (B, N, Cout)
    assert jnp.allclose(out, ref, atol=5e-2, rtol=5e-2)

    print("KERNEL_OK")
</pallas_src>

<mosaic_0001>
module attributes {stable_mosaic.version = 11 : i64} {
  func.func private @main(%arg0: i32) attributes {dimension_semantics = [#tpu.dimension_semantics<core_parallel>], iteration_bounds = array<i64: 2>, tpu.core_type = #tpu.core_type<sc_scalar_subcore>, window_params = []} {
    return
  }
}

module attributes {stable_mosaic.version = 11 : i64} {
  func.func private @main(%arg0: i32) attributes {dimension_semantics = [#tpu.dimension_semantics<core_parallel>], iteration_bounds = array<i64: 2>, tpu.core_type = #tpu.core_type<sc_scalar_subcore>, window_params = []} {
    return
  }
}

module attributes {stable_mosaic.version = 11 : i64} {
  func.func @_xw_kernel(%arg0: i32, %arg1: memref<256x8xbf16, #tpu.memory_space<vmem>>, %arg2: memref<8x16xbf16, #tpu.memory_space<vmem>>, %arg3: memref<256x1xf32, #tpu.memory_space<vmem>>, %arg4: memref<256x16xbf16, #tpu.memory_space<vmem>>) attributes {dimension_semantics = [#tpu.dimension_semantics<parallel>], iteration_bounds = array<i64: 1>, scalar_prefetch = 0 : i64, scratch_operands = 0 : i64, tpu.core_type = #tpu.core_type<tc>, window_params = [{transform_indices = @transform_0, window_bounds = array<i64: 256, 8>}, {pipeline_mode = #tpu.pipeline_mode<synchronous>, transform_indices = @transform_1, window_bounds = array<i64: 8, 16>}, {transform_indices = @transform_2, window_bounds = array<i64: 256, 1>}, {transform_indices = @transform_3, window_bounds = array<i64: 256, 16>}]} {
    %c0 = arith.constant 0 : index
    %c0_0 = arith.constant 0 : index
    %0 = vector.load %arg1[%c0, %c0_0] : memref<256x8xbf16, #tpu.memory_space<vmem>>, vector<256x8xbf16>
    %c0_1 = arith.constant 0 : index
    %c0_2 = arith.constant 0 : index
    %1 = vector.load %arg2[%c0_1, %c0_2] : memref<8x16xbf16, #tpu.memory_space<vmem>>, vector<8x16xbf16>
    %cst = arith.constant dense<0.000000e+00> : vector<256x16xf32>
    %2 = tpu.matmul %0, %1, %cst {dimension_numbers = #tpu.dot_dimension_numbers<[1], [0], [0], [1], [0, 0, 1, 1], [], []>} : vector<256x8xbf16>, vector<8x16xbf16>, vector<256x16xf32> -> vector<256x16xf32>
    %c0_3 = arith.constant 0 : index
    %c0_4 = arith.constant 0 : index
    %3 = vector.load %arg3[%c0_3, %c0_4] : memref<256x1xf32, #tpu.memory_space<vmem>>, vector<256x1xf32>
    %4 = vector.broadcast %3 : vector<256x1xf32> to vector<256x16xf32>
    %5 = arith.mulf %2, %4 : vector<256x16xf32>
    %6 = arith.truncf %5 : vector<256x16xf32> to vector<256x16xbf16>
    %c0_5 = arith.constant 0 : index
    %c0_6 = arith.constant 0 : index
    %7 = vector.load %arg4[%c0_5, %c0_6] : memref<256x16xbf16, #tpu.memory_space<vmem>>, vector<256x16xbf16>
    tpu.vector_store %arg4[%c0_5, %c0_6], %6 {strides = array<i32>} : memref<256x16xbf16, #tpu.memory_space<vmem>>, vector<256x16xbf16>,
    return
  }
  func.func @transform_0(%arg0: i32) -> (i32, i32) {
    %c0_i32 = arith.constant 0 : i32
    %c0_i32_0 = arith.constant 0 : i32
    return %arg0, %c0_i32 : i32, i32
  }
  func.func @transform_1(%arg0: i32) -> (i32, i32) {
    %c0_i32 = arith.constant 0 : i32
    %c0_i32_0 = arith.constant 0 : i32
    %c0_i32_1 = arith.constant 0 : i32
    return %c0_i32, %c0_i32_0 : i32, i32
  }
  func.func @transform_2(%arg0: i32) -> (i32, i32) {
    %c0_i32 = arith.constant 0 : i32
    %c0_i32_0 = arith.constant 0 : i32
    return %arg0, %c0_i32 : i32, i32
  }
  func.func @transform_3(%arg0: i32) -> (i32, i32) {
    %c0_i32 = arith.constant 0 : i32
    %c0_i32_0 = arith.constant 0 : i32
    return %arg0, %c0_i32 : i32, i32
  }
}

module attributes {stable_mosaic.version = 11 : i64} {
  func.func @_agg_kernel(%arg0: i32, %arg1: i32, %arg2: i32, %arg3: memref<128x128xbf16, #tpu.memory_space<vmem>>, %arg4: memref<128x128xbf16, #tpu.memory_space<vmem>>, %arg5: memref<128x1xf32, #tpu.memory_space<vmem>>, %arg6: memref<1x128xf32, #tpu.memory_space<vmem>>, %arg7: memref<128x128xf32, #tpu.memory_space<vmem>>, %arg8: memref<128x128xf32, #tpu.memory_space<vmem>>) attributes {dimension_semantics = [#tpu.dimension_semantics<parallel>, #tpu.dimension_semantics<parallel>, #tpu.dimension_semantics<arbitrary>], iteration_bounds = array<i64: 1, 1, 1>, scalar_prefetch = 0 : i64, scratch_operands = 1 : i64, tpu.core_type = #tpu.core_type<tc>, window_params = [{transform_indices = @transform_0, window_bounds = array<i64: 128, 128>}, {transform_indices = @transform_1, window_bounds = array<i64: 128, 128>}, {transform_indices = @transform_2, window_bounds = array<i64: 128, 1>}, {transform_indices = @transform_3, window_bounds = array<i64: 1, 128>}, {transform_indices = @transform_4, window_bounds = array<i64: 128, 128>}]} {
    %c0_i32 = arith.constant 0 : i32
    %0 = arith.cmpi eq, %arg2, %c0_i32 : i32
    %1 = arith.extui %0 : i1 to i32
    %c0_i32_0 = arith.constant 0 : i32
    %2 = arith.cmpi ne, %1, %c0_i32_0 : i32
    scf.if %2 {
      %cst_10 = arith.constant 0.000000e+00 : f32
      %12 = vector.broadcast %cst_10 : f32 to vector<128x128xf32>
      %c0_11 = arith.constant 0 : index
      %c0_12 = arith.constant 0 : index
      %13 = vector.load %arg8[%c0_11, %c0_12] : memref<128x128xf32, #tpu.memory_space<vmem>>, vector<128x128xf32>
      tpu.vector_store %arg8[%c0_11, %c0_12], %12 {strides = array<i32>} : memref<128x128xf32, #tpu.memory_space<vmem>>, vector<128x128xf32>,
    } else {
    }
    %c0 = arith.constant 0 : index
    %c0_1 = arith.constant 0 : index
    %3 = vector.load %arg8[%c0, %c0_1] : memref<128x128xf32, #tpu.memory_space<vmem>>, vector<128x128xf32>
    %c0_2 = arith.constant 0 : index
    %c0_3 = arith.constant 0 : index
    %4 = vector.load %arg3[%c0_2, %c0_3] : memref<128x128xbf16, #tpu.memory_space<vmem>>, vector<128x128xbf16>
    %c0_4 = arith.constant 0 : index
    %c0_5 = arith.constant 0 : index
    %5 = vector.load %arg4[%c0_4, %c0_5] : memref<128x128xbf16, #tpu.memory_space<vmem>>, vector<128x128xbf16>
    %cst = arith.constant dense<0.000000e+00> : vector<128x128xf32>
    %6 = tpu.matmul %4, %5, %cst {dimension_numbers = #tpu.dot_dimension_numbers<[1], [0], [0], [1], [0, 0, 1, 1], [], []>} : vector<128x128xbf16>, vector<128x128xbf16>, vector<128x128xf32> -> vector<128x128xf32>
    %7 = arith.addf %3, %6 : vector<128x128xf32>
    %c0_6 = arith.constant 0 : index
    %c0_7 = arith.constant 0 : index
    %8 = vector.load %arg8[%c0_6, %c0_7] : memref<128x128xf32, #tpu.memory_space<vmem>>, vector<128x128xf32>
    tpu.vector_store %arg8[%c0_6, %c0_7], %7 {strides = array<i32>} : memref<128x128xf32, #tpu.memory_space<vmem>>, vector<128x128xf32>,
    %c0_i32_8 = arith.constant 0 : i32
    %9 = arith.cmpi eq, %arg2, %c0_i32_8 : i32
    %10 = arith.extui %9 : i1 to i32
    %c0_i32_9 = arith.constant 0 : i32
    %11 = arith.cmpi ne, %10, %c0_i32_9 : i32
    scf.if %11 {
      %c0_10 = arith.constant 0 : index
      %c0_11 = arith.constant 0 : index
      %12 = vector.load %arg8[%c0_10, %c0_11] : memref<128x128xf32, #tpu.memory_space<vmem>>, vector<128x128xf32>
      %c0_12 = arith.constant 0 : index
      %c0_13 = arith.constant 0 : index
      %13 = vector.load %arg5[%c0_12, %c0_13] : memref<128x1xf32, #tpu.memory_space<vmem>>, vector<128x1xf32>
      %14 = vector.broadcast %13 : vector<128x1xf32> to vector<128x128xf32>
      %15 = arith.mulf %12, %14 : vector<128x128xf32>
      %c0_14 = arith.constant 0 : index
      %c0_15 = arith.constant 0 : index
      %16 = vector.load %arg6[%c0_14, %c0_15] : memref<1x128xf32, #tpu.memory_space<vmem>>, vector<1x128xf32>
      %17 = vector.broadcast %16 : vector<1x128xf32> to vector<128x128xf32>
      %18 = arith.addf %15, %17 : vector<128x128xf32>
      %c0_16 = arith.constant 0 : index
      %c0_17 = arith.constant 0 : index
      %19 = vector.load %arg7[%c0_16, %c0_17] : memref<128x128xf32, #tpu.memory_space<vmem>>, vector<128x128xf32>
      tpu.vector_store %arg7[%c0_16, %c0_17], %18 {strides = array<i32>} : memref<128x128xf32, #tpu.memory_space<vmem>>, vector<128x128xf32>,
    } else {
    }
    return
  }
  func.func @transform_0(%arg0: i32, %arg1: i32, %arg2: i32) -> (i32, i32) {
    %c0_i32 = arith.constant 0 : i32
    return %arg0, %arg2 : i32, i32
  }
  func.func @transform_1(%arg0: i32, %arg1: i32, %arg2: i32) -> (i32, i32) {
    %c0_i32 = arith.constant 0 : i32
    return %arg2, %arg1 : i32, i32
  }
  func.func @transform_2(%arg0: i32, %arg1: i32, %arg2: i32) -> (i32, i32) {
    %c0_i32 = arith.constant 0 : i32
    %c0_i32_0 = arith.constant 0 : i32
    return %arg0, %c0_i32 : i32, i32
  }
  func.func @transform_3(%arg0: i32, %arg1: i32, %arg2: i32) -> (i32, i32) {
    %c0_i32 = arith.constant 0 : i32
    %c0_i32_0 = arith.constant 0 : i32
    return %c0_i32, %arg1 : i32, i32
  }
  func.func @transform_4(%arg0: i32, %arg1: i32, %arg2: i32) -> (i32, i32) {
    %c0_i32 = arith.constant 0 : i32
    return %arg0, %arg1 : i32, i32
  }
}

</mosaic_0001>

<llo_original>
// kernel: tile.8
$region0: #{tile.8}
  #allocation0 [shape = 's32[1]{0}', space=sflag, size = 0x4, scoped, tag = 'scoped memory for tile.8']
  %s0 = inlined_call_operand.vmem [shape: f32[16], index: 0, kind: input, shape index: {}]
  %s1 = inlined_call_operand.vmem [shape: f32[2,16], index: 1, kind: output, shape index: {}]
  // Predicated region
  $region2: #{tile.8} parent=0 // pred_check
    _
  $region3: #{tile.8} parent=0 // pred_check_branch
    %3 = sbr.rel (0) target = $region5
  $region4: #{tile.8} parent=0 // pred_region
    _
  $region5: #{tile.8} parent=0 // pred_fallthru
    _
  %v4 = vld [vmem:[%s0] ss:$0 sm:$0xff]
  %5 = vst [vmem:[%s1] sm:$0x3] %v4

// kernel: tile.9
$region0: #{tile.9}
  %s0 = inlined_call_operand.vmem [shape: f32[2,16], index: 0, kind: input, shape index: {}]
  %s1 = inlined_call_operand.vmem [shape: f32[32], index: 1, kind: output, shape index: {}]
  $region1: #{tile.9} parent=0
    #allocation0 [shape = 'u8[4096]{0}', space=vmem, size = 0x1000, scoped, tag = 'scoped mem for output reshape']
    #allocation1 [shape = 'u8[4096]{0}', space=vmem, size = 0x1000, scoped, tag = 'scoped mem for input reshape']
    %s3 = sshllo.u32 0, 2
    %v4 = vld [vmem:[%s0] sm:%s3]
    %5 = vst [vmem:[#allocation1] sm:%s3] %v4
    %v6 = vld [vmem:[#allocation1] sm:$0x1]
    %vm7 = vcmask 130048
    %8 = vst.msk [vmem:[#allocation0] sm:$0x1] %vm7, %v6
    %s9 = scalar_lea.vmem [#allocation1], 1
    %v10 = vld [vmem:[%s9] sm:$0x1]
    %11 = vrot.lane.b32.xlu0 %v10, 16
    %v12 = vpop.permute.xlu0 %11
    %vm13 = vcmask 261248
    %14 = vst.msk [vmem:[#allocation0] sm:$0x1] %vm13, %v12
    %s16 = sshllo.u32 0, 1
    %v18 = vld [vmem:[#allocation0] sm:%s16]
    %s19 = sshllo.u32 0, 1
    %20 = vst [vmem:[%s1] sm:%s19] %v18

// kernel: pyg_gcn_forward.2
$region0: #{pyg_gcn_forward.2}
  #allocation0 [shape = 'u32[]', space=smem, size = 0x4, offset = 0x4, fixed_abs, tag = 'smem constant byte address 0x4 - core index']
  #allocation1 [shape = 'u32[144,128]{1,0:T(1,128)}', space=vmem, size = 0x12000, scoped, tag = 'internal scratch']
  %s0 = inlined_call_operand.vmem [shape: bf16[256,8], index: 0, kind: input, shape index: {}]
  %s1 = inlined_call_operand.vmem [shape: bf16[8,16], index: 1, kind: input, shape index: {}]
  %s2 = inlined_call_operand.vmem [shape: f32[256,1], index: 2, kind: input, shape index: {}]
  %s3 = inlined_call_operand.vmem [shape: bf16[256,16], index: 3, kind: output, shape index: {}]
  %s4 = sld [smem:[#allocation0]]
  $region22: #{pyg_gcn_forward.2} parent=0
    _
  %s6 = ssub.s32 1, %s4
  %s7 = scalar_select 0, %s6, %s4
  // Predicated region
  $region2: #{pyg_gcn_forward.2} parent=0 // pred_check
    _
  $region3: #{pyg_gcn_forward.2} parent=0 // pred_check_branch
    %9 = sbr.rel (0) target = $region5
  $region4: #{pyg_gcn_forward.2} parent=0 // pred_region
    _
  $region5: #{pyg_gcn_forward.2} parent=0 // pred_fallthru
    _
  // Predicated region
  $region6: #{pyg_gcn_forward.2} parent=0 // pred_check
    _
  $region7: #{pyg_gcn_forward.2} parent=0 // pred_check_branch
    %11 = sbr.rel (0) target = $region9
  $region8: #{pyg_gcn_forward.2} parent=0 // pred_region
    _
  $region9: #{pyg_gcn_forward.2} parent=0 // pred_fallthru
    _
  // Predicated region
  $region10: #{pyg_gcn_forward.2} parent=0 // pred_check
    _
  $region11: #{pyg_gcn_forward.2} parent=0 // pred_check_branch
    %13 = sbr.rel (0) target = $region13
  $region12: #{pyg_gcn_forward.2} parent=0 // pred_region
    _
  $region13: #{pyg_gcn_forward.2} parent=0 // pred_fallthru
    _
  %v15 = vld [vmem:[%s0] sm:$0xf]
  %v16 = vld [vmem:[%s0 + $0x4] sm:$0xf]
  %v17 = vld [vmem:[%s0 + $0x8] sm:$0xf]
  %v18 = vld [vmem:[%s0 + $0xc] sm:$0xf]
  %v19 = vld [vmem:[%s0 + $0x10] sm:$0xf]
  %v20 = vld [vmem:[%s0 + $0x14] sm:$0xf]
  %v21 = vld [vmem:[%s0 + $0x18] sm:$0xf]
  %v22 = vld [vmem:[%s0 + $0x1c] sm:$0xf]
  %v23 = vld [vmem:[%s0 + $0x20] sm:$0xf]
  %v24 = vld [vmem:[%s0 + $0x24] sm:$0xf]
  %v25 = vld [vmem:[%s0 + $0x28] sm:$0xf]
  %v26 = vld [vmem:[%s0 + $0x2c] sm:$0xf]
  %v27 = vld [vmem:[%s0 + $0x30] sm:$0xf]
  %v28 = vld [vmem:[%s0 + $0x34] sm:$0xf]
  %v29 = vld [vmem:[%s0 + $0x38] sm:$0xf]
  %v30 = vld [vmem:[%s0 + $0x3c] sm:$0xf]
  %v31 = vld [vmem:[%s0 + $0x40] sm:$0xf]
  %v32 = vld [vmem:[%s0 + $0x44] sm:$0xf]
  %v33 = vld [vmem:[%s0 + $0x48] sm:$0xf]
  %v34 = vld [vmem:[%s0 + $0x4c] sm:$0xf]
  %v35 = vld [vmem:[%s0 + $0x50] sm:$0xf]
  %v36 = vld [vmem:[%s0 + $0x54] sm:$0xf]
  %v37 = vld [vmem:[%s0 + $0x58] sm:$0xf]
  %v38 = vld [vmem:[%s0 + $0x5c] sm:$0xf]
  %v39 = vld [vmem:[%s0 + $0x60] sm:$0xf]
  %v40 = vld [vmem:[%s0 + $0x64] sm:$0xf]
  %v41 = vld [vmem:[%s0 + $0x68] sm:$0xf]
  %v42 = vld [vmem:[%s0 + $0x6c] sm:$0xf]
  %v43 = vld [vmem:[%s0 + $0x70] sm:$0xf]
  %v44 = vld [vmem:[%s0 + $0x74] sm:$0xf]
  %v45 = vld [vmem:[%s0 + $0x78] sm:$0xf]
  %v46 = vld [vmem:[%s0 + $0x7c] sm:$0xf]
  %v47 = vld [vmem:[%s1] sm:$0xf]
  %v80 = vunpack.c.l.b16 %v15
  %v81 = vunpack.c.l.b16 %v16
  %v82 = vunpack.c.l.b16 %v17
  %v83 = vunpack.c.l.b16 %v18
  %v84 = vunpack.c.l.b16 %v19
  %v85 = vunpack.c.l.b16 %v20
  %v86 = vunpack.c.l.b16 %v21
  %v87 = vunpack.c.l.b16 %v22
  %v88 = vunpack.c.l.b16 %v23
  %v89 = vunpack.c.l.b16 %v24
  %v90 = vunpack.c.l.b16 %v25
  %v91 = vunpack.c.l.b16 %v26
  %v92 = vunpack.c.l.b16 %v27
  %v93 = vunpack.c.l.b16 %v28
  %v94 = vunpack.c.l.b16 %v29
  %v95 = vunpack.c.l.b16 %v30
  %v96 = vunpack.c.l.b16 %v31
  %v97 = vunpack.c.l.b16 %v32
  %v98 = vunpack.c.l.b16 %v33
  %v99 = vunpack.c.l.b16 %v34
  %v100 = vunpack.c.l.b16 %v35
  %v101 = vunpack.c.l.b16 %v36
  %v102 = vunpack.c.l.b16 %v37
  %v103 = vunpack.c.l.b16 %v38
  %v104 = vunpack.c.l.b16 %v39
  %v105 = vunpack.c.l.b16 %v40
  %v106 = vunpack.c.l.b16 %v41
  %v107 = vunpack.c.l.b16 %v42
  %v108 = vunpack.c.l.b16 %v43
  %v109 = vunpack.c.l.b16 %v44
  %v110 = vunpack.c.l.b16 %v45
  %v111 = vunpack.c.l.b16 %v46
  %v112 = vpack.c.b16 %v81, %v80
  %v113 = vpack.c.b16 %v83, %v82
  %v114 = vpack.c.b16 %v85, %v84
  %v115 = vpack.c.b16 %v87, %v86
  %v116 = vpack.c.b16 %v89, %v88
  %v117 = vpack.c.b16 %v91, %v90
  %v118 = vpack.c.b16 %v93, %v92
  %v119 = vpack.c.b16 %v95, %v94
  %v120 = vpack.c.b16 %v97, %v96
  %v121 = vpack.c.b16 %v99, %v98
  %v122 = vpack.c.b16 %v101, %v100
  %v123 = vpack.c.b16 %v103, %v102
  %v124 = vpack.c.b16 %v105, %v104
  %v125 = vpack.c.b16 %v107, %v106
  %v126 = vpack.c.b16 %v109, %v108
  %v127 = vpack.c.b16 %v111, %v110
  %vm128 = vcmask 64512
  %v130 = vsel %vm128, %v112, 0
  %v133 = vsel %vm128, %v113, 0
  %v136 = vsel %vm128, %v114, 0
  %v139 = vsel %vm128, %v115, 0
  %v142 = vsel %vm128, %v116, 0
  %v145 = vsel %vm128, %v117, 0
  %v148 = vsel %vm128, %v118, 0
  %v151 = vsel %vm128, %v119, 0
  %v154 = vsel %vm128, %v120, 0
  %v157 = vsel %vm128, %v121, 0
  %v160 = vsel %vm128, %v122, 0
  %v163 = vsel %vm128, %v123, 0
  %v166 = vsel %vm128, %v124, 0
  %v169 = vsel %vm128, %v125, 0
  %v172 = vsel %vm128, %v126, 0
  %v175 = vsel %vm128, %v127, 0
  %vm177 = vcmask 1043456
  %v179 = vsel %vm177, %v47, 0
  %181 = vmatprep.subr.bf16.mxu0 0
  %182 = vmatpush1.bf16.msra.mxu0 %v179
  %183 = vmatprep.subr.bf16.mxu0 0
  %184 = vmatpush1.bf16.msra.mxu0 0
  %185 = vmatprep.subr.bf16.mxu0 0
  %186 = vmatpush1.bf16.msra.mxu0 0
  %187 = vmatprep.subr.bf16.mxu0 0
  %188 = vmatpush1.bf16.msra.mxu0 0
  %189 = vmatprep.subr.bf16.mxu0 0
  %190 = vmatpush1.bf16.msra.mxu0 0
  %191 = vmatprep.subr.bf16.mxu0 0
  %192 = vmatpush1.bf16.msra.mxu0 0
  %193 = vmatprep.subr.bf16.mxu0 0
  %194 = vmatpush1.bf16.msra.mxu0 0
  %195 = vmatprep.subr.bf16.mxu0 0
  %196 = vmatpush1.bf16.msra.mxu0 0
  %197 = vmatprep.subr.bf16.mxu0 0
  %198 = vmatpush1.bf16.msra.mxu0 0
  %199 = vmatprep.subr.bf16.mxu0 0
  %200 = vmatpush1.bf16.msra.mxu0 0
  %201 = vmatprep.subr.bf16.mxu0 0
  %202 = vmatpush1.bf16.msra.mxu0 0
  %203 = vmatprep.subr.bf16.mxu0 0
  %204 = vmatpush1.bf16.msra.mxu0 0
  %205 = vmatprep.subr.bf16.mxu0 0
  %206 = vmatpush1.bf16.msra.mxu0 0
  %207 = vmatprep.subr.bf16.mxu0 0
  %208 = vmatpush1.bf16.msra.mxu0 0
  %209 = vmatprep.subr.bf16.mxu0 0
  %210 = vmatpush1.bf16.msra.mxu0 0
  %211 = vmatprep.subr.bf16.mxu0 0
  %212 = vmatpush1.bf16.msra.mxu0 0
  %213 = vmatprep.mubr.bf16.mxu0 0
  %214 = vmatmul.mubr.bf16.gmra.mrb[0].mxu0 %v130
  %v215 = vpop.f32.mrb[0].mxu0
  %v216 = vadd.f32 0.0, %v215
  %v217 = vpop.f32.mrb[0].mxu0
  %v218 = vpop.f32.mrb[0].mxu0
  %v219 = vadd.f32 0.0, %v218
  %v220 = vpop.f32.mrb[0].mxu0
  %221 = vmatprep.mubr.bf16.mxu0 0
  %222 = vmatmul.mubr.bf16.gmra.mrb[0].mxu0 %v133
  %v223 = vpop.f32.mrb[0].mxu0
  %v224 = vadd.f32 0.0, %v223
  %v225 = vpop.f32.mrb[0].mxu0
  %v226 = vpop.f32.mrb[0].mxu0
  %v227 = vadd.f32 0.0, %v226
  %v228 = vpop.f32.mrb[0].mxu0
  %229 = vmatprep.mubr.bf16.mxu0 0
  %230 = vmatmul.mubr.bf16.gmra.mrb[0].mxu0 %v136
  %v231 = vpop.f32.mrb[0].mxu0
  %v232 = vadd.f32 0.0, %v231
  %v233 = vpop.f32.mrb[0].mxu0
  %v234 = vpop.f32.mrb[0].mxu0
  %v235 = vadd.f32 0.0, %v234
  %v236 = vpop.f32.mrb[0].mxu0
  %237 = vmatprep.mubr.bf16.mxu0 0
  %238 = vmatmul.mubr.bf16.gmra.mrb[0].mxu0 %v139
  %v239 = vpop.f32.mrb[0].mxu0
  %v240 = vadd.f32 0.0, %v239
  %v241 = vpop.f32.mrb[0].mxu0
  %v242 = vpop.f32.mrb[0].mxu0
  %v243 = vadd.f32 0.0, %v242
  %v244 = vpop.f32.mrb[0].mxu0
  %245 = vmatprep.mubr.bf16.mxu0 0
  %246 = vmatmul.mubr.bf16.gmra.mrb[0].mxu0 %v142
  %v247 = vpop.f32.mrb[0].mxu0
  %v248 = vadd.f32 0.0, %v247
  %v249 = vpop.f32.mrb[0].mxu0
  %v250 = vpop.f32.mrb[0].mxu0
  %v251 = vadd.f32 0.0, %v250
  %v252 = vpop.f32.mrb[0].mxu0
  %253 = vmatprep.mubr.bf16.mxu0 0
  %254 = vmatmul.mubr.bf16.gmra.mrb[0].mxu0 %v145
  %v255 = vpop.f32.mrb[0].mxu0
  %v256 = vadd.f32 0.0, %v255
  %v257 = vpop.f32.mrb[0].mxu0
  %v258 = vpop.f32.mrb[0].mxu0
  %v259 = vadd.f32 0.0, %v258
  %v260 = vpop.f32.mrb[0].mxu0
  %261 = vmatprep.mubr.bf16.mxu0 0
  %262 = vmatmul.mubr.bf16.gmra.mrb[0].mxu0 %v148
  %v263 = vpop.f32.mrb[0].mxu0
  %v264 = vadd.f32 0.0, %v263
  %v265 = vpop.f32.mrb[0].mxu0
  %v266 = vpop.f32.mrb[0].mxu0
  %v267 = vadd.f32 0.0, %v266
  %v268 = vpop.f32.mrb[0].mxu0
  %269 = vmatprep.mubr.bf16.mxu0 0
  %270 = vmatmul.mubr.bf16.gmra.mrb[0].mxu0 %v151
  %v271 = vpop.f32.mrb[0].mxu0
  %v272 = vadd.f32 0.0, %v271
  %v273 = vpop.f32.mrb[0].mxu0
  %v274 = vpop.f32.mrb[0].mxu0
  %v275 = vadd.f32 0.0, %v274
  %v276 = vpop.f32.mrb[0].mxu0
  %277 = vmatprep.mubr.bf16.mxu0 0
  %278 = vmatmul.mubr.bf16.gmra.mrb[0].mxu0 %v154
  %v279 = vpop.f32.mrb[0].mxu0
  %v280 = vadd.f32 0.0, %v279
  %v281 = vpop.f32.mrb[0].mxu0
  %v282 = vpop.f32.mrb[0].mxu0
  %v283 = vadd.f32 0.0, %v282
  %v284 = vpop.f32.mrb[0].mxu0
  %285 = vmatprep.mubr.bf16.mxu0 0
  %286 = vmatmul.mubr.bf16.gmra.mrb[0].mxu0 %v157
  %v287 = vpop.f32.mrb[0].mxu0
  %v288 = vadd.f32 0.0, %v287
  %v289 = vpop.f32.mrb[0].mxu0
  %v290 = vpop.f32.mrb[0].mxu0
  %v291 = vadd.f32 0.0, %v290
  %v292 = vpop.f32.mrb[0].mxu0
  %293 = vmatprep.mubr.bf16.mxu0 0
  %294 = vmatmul.mubr.bf16.gmra.mrb[0].mxu0 %v160
  %v295 = vpop.f32.mrb[0].mxu0
  %v296 = vadd.f32 0.0, %v295
  %v297 = vpop.f32.mrb[0].mxu0
  %v298 = vpop.f32.mrb[0].mxu0
  %v299 = vadd.f32 0.0, %v298
  %v300 = vpop.f32.mrb[0].mxu0
  %301 = vmatprep.mubr.bf16.mxu0 0
  %302 = vmatmul.mubr.bf16.gmra.mrb[0].mxu0 %v163
  %v303 = vpop.f32.mrb[0].mxu0
  %v304 = vadd.f32 0.0, %v303
  %v305 = vpop.f32.mrb[0].mxu0
  %v306 = vpop.f32.mrb[0].mxu0
  %v307 = vadd.f32 0.0, %v306
  %v308 = vpop.f32.mrb[0].mxu0
  %309 = vmatprep.mubr.bf16.mxu0 0
  %310 = vmatmul.mubr.bf16.gmra.mrb[0].mxu0 %v166
  %v311 = vpop.f32.mrb[0].mxu0
  %v312 = vadd.f32 0.0, %v311
  %v313 = vpop.f32.mrb[0].mxu0
  %v314 = vpop.f32.mrb[0].mxu0
  %v315 = vadd.f32 0.0, %v314
  %v316 = vpop.f32.mrb[0].mxu0
  %317 = vmatprep.mubr.bf16.mxu0 0
  %318 = vmatmul.mubr.bf16.gmra.mrb[0].mxu0 %v169
  %v319 = vpop.f32.mrb[0].mxu0
  %v320 = vadd.f32 0.0, %v319
  %v321 = vpop.f32.mrb[0].mxu0
  %v322 = vpop.f32.mrb[0].mxu0
  %v323 = vadd.f32 0.0, %v322
  %v324 = vpop.f32.mrb[0].mxu0
  %325 = vmatprep.mubr.bf16.mxu0 0
  %326 = vmatmul.mubr.bf16.gmra.mrb[0].mxu0 %v172
  %v327 = vpop.f32.mrb[0].mxu0
  %v328 = vadd.f32 0.0, %v327
  %v329 = vpop.f32.mrb[0].mxu0
  %v330 = vpop.f32.mrb[0].mxu0
  %v331 = vadd.f32 0.0, %v330
  %v332 = vpop.f32.mrb[0].mxu0
  %333 = vmatprep.mubr.bf16.mxu0 0
  %334 = vmatmul.mubr.bf16.gmra.mrb[0].mxu0 %v175
  %v335 = vpop.f32.mrb[0].mxu0
  %v336 = vadd.f32 0.0, %v335
  %v337 = vpop.f32.mrb[0].mxu0
  %v338 = vpop.f32.mrb[0].mxu0
  %v339 = vadd.f32 0.0, %v338
  %v340 = vpop.f32.mrb[0].mxu0
  %341 = vdwg.mxu0
  %v342 = vld [vmem:[%s2] sm:$0xff]
  %v343 = vld [vmem:[%s2 + $0x8] sm:$0xff]
  %v344 = vld [vmem:[%s2 + $0x10] sm:$0xff]
  %v345 = vld [vmem:[%s2 + $0x18] sm:$0xff]
  %v346 = vld [vmem:[%s2 + $0x20] sm:$0xff]
  %v347 = vld [vmem:[%s2 + $0x28] sm:$0xff]
  %v348 = vld [vmem:[%s2 + $0x30] sm:$0xff]
  %v349 = vld [vmem:[%s2 + $0x38] sm:$0xff]
  %v350 = vld [vmem:[%s2 + $0x40] sm:$0xff]
  %v351 = vld [vmem:[%s2 + $0x48] sm:$0xff]
  %v352 = vld [vmem:[%s2 + $0x50] sm:$0xff]
  %v353 = vld [vmem:[%s2 + $0x58] sm:$0xff]
  %v354 = vld [vmem:[%s2 + $0x60] sm:$0xff]
  %v355 = vld [vmem:[%s2 + $0x68] sm:$0xff]
  %v356 = vld [vmem:[%s2 + $0x70] sm:$0xff]
  %v357 = vld [vmem:[%s2 + $0x78] sm:$0xff]
  %v358 = vld [vmem:[%s2 + $0x80] sm:$0xff]
  %v359 = vld [vmem:[%s2 + $0x88] sm:$0xff]
  %v360 = vld [vmem:[%s2 + $0x90] sm:$0xff]
  %v361 = vld [vmem:[%s2 + $0x98] sm:$0xff]
  %v362 = vld [vmem:[%s2 + $0xa0] sm:$0xff]
  %v363 = vld [vmem:[%s2 + $0xa8] sm:$0xff]
  %v364 = vld [vmem:[%s2 + $0xb0] sm:$0xff]
  %v365 = vld [vmem:[%s2 + $0xb8] sm:$0xff]
  %v366 = vld [vmem:[%s2 + $0xc0] sm:$0xff]
  %v367 = vld [vmem:[%s2 + $0xc8] sm:$0xff]
  %v368 = vld [vmem:[%s2 + $0xd0] sm:$0xff]
  %v369 = vld [vmem:[%s2 + $0xd8] sm:$0xff]
  %v370 = vld [vmem:[%s2 + $0xe0] sm:$0xff]
  %v371 = vld [vmem:[%s2 + $0xe8] sm:$0xff]
  %v372 = vld [vmem:[%s2 + $0xf0] sm:$0xff]
  %v373 = vld [vmem:[%s2 + $0xf8] sm:$0xff]
  %375 = vset.pattern.permute.xlu0 0
  %376 = vperm.xlu0 %375, %v342
  %v377 = vpop.permute.xlu0 %376
  %380 = vset.pattern.permute.xlu0 0
  %381 = vperm.xlu0 %380, %v343
  %v382 = vpop.permute.xlu0 %381
  %385 = vset.pattern.permute.xlu0 0
  %386 = vperm.xlu0 %385, %v344
  %v387 = vpop.permute.xlu0 %386
  %390 = vset.pattern.permute.xlu0 0
  %391 = vperm.xlu0 %390, %v345
  %v392 = vpop.permute.xlu0 %391
  %395 = vset.pattern.permute.xlu0 0
  %396 = vperm.xlu0 %395, %v346
  %v397 = vpop.permute.xlu0 %396
  %400 = vset.pattern.permute.xlu0 0
  %401 = vperm.xlu0 %400, %v347
  %v402 = vpop.permute.xlu0 %401
  %405 = vset.pattern.permute.xlu0 0
  %406 = vperm.xlu0 %405, %v348
  %v407 = vpop.permute.xlu0 %406
  %410 = vset.pattern.permute.xlu0 0
  %411 = vperm.xlu0 %410, %v349
  %v412 = vpop.permute.xlu0 %411
  %415 = vset.pattern.permute.xlu0 0
  %416 = vperm.xlu0 %415, %v350
  %v417 = vpop.permute.xlu0 %416
  %420 = vset.pattern.permute.xlu0 0
  %421 = vperm.xlu0 %420, %v351
  %v422 = vpop.permute.xlu0 %421
  %425 = vset.pattern.permute.xlu0 0
  %426 = vperm.xlu0 %425, %v352
  %v427 = vpop.permute.xlu0 %426
  %430 = vset.pattern.permute.xlu0 0
  %431 = vperm.xlu0 %430, %v353
  %v432 = vpop.permute.xlu0 %431
  %435 = vset.pattern.permute.xlu0 0
  %436 = vperm.xlu0 %435, %v354
  %v437 = vpop.permute.xlu0 %436
  %440 = vset.pattern.permute.xlu0 0
  %441 = vperm.xlu0 %440, %v355
  %v442 = vpop.permute.xlu0 %441
  %445 = vset.pattern.permute.xlu0 0
  %446 = vperm.xlu0 %445, %v356
  %v447 = vpop.permute.xlu0 %446
  %450 = vset.pattern.permute.xlu0 0
  %451 = vperm.xlu0 %450, %v357
  %v452 = vpop.permute.xlu0 %451
  %455 = vset.pattern.permute.xlu0 0
  %456 = vperm.xlu0 %455, %v358
  %v457 = vpop.permute.xlu0 %456
  %460 = vset.pattern.permute.xlu0 0
  %461 = vperm.xlu0 %460, %v359
  %v462 = vpop.permute.xlu0 %461
  %465 = vset.pattern.permute.xlu0 0
  %466 = vperm.xlu0 %465, %v360
  %v467 = vpop.permute.xlu0 %466
  %470 = vset.pattern.permute.xlu0 0
  %471 = vperm.xlu0 %470, %v361
  %v472 = vpop.permute.xlu0 %471
  %475 = vset.pattern.permute.xlu0 0
  %476 = vperm.xlu0 %475, %v362
  %v477 = vpop.permute.xlu0 %476
  %480 = vset.pattern.permute.xlu0 0
  %481 = vperm.xlu0 %480, %v363
  %v482 = vpop.permute.xlu0 %481
  %485 = vset.pattern.permute.xlu0 0
  %486 = vperm.xlu0 %485, %v364
  %v487 = vpop.permute.xlu0 %486
  %490 = vset.pattern.permute.xlu0 0
  %491 = vperm.xlu0 %490, %v365
  %v492 = vpop.permute.xlu0 %491
  %495 = vset.pattern.permute.xlu0 0
  %496 = vperm.xlu0 %495, %v366
  %v497 = vpop.permute.xlu0 %496
  %500 = vset.pattern.permute.xlu0 0
  %501 = vperm.xlu0 %500, %v367
  %v502 = vpop.permute.xlu0 %501
  %505 = vset.pattern.permute.xlu0 0
  %506 = vperm.xlu0 %505, %v368
  %v507 = vpop.permute.xlu0 %506
  %510 = vset.pattern.permute.xlu0 0
  %511 = vperm.xlu0 %510, %v369
  %v512 = vpop.permute.xlu0 %511
  %515 = vset.pattern.permute.xlu0 0
  %516 = vperm.xlu0 %515, %v370
  %v517 = vpop.permute.xlu0 %516
  %520 = vset.pattern.permute.xlu0 0
  %521 = vperm.xlu0 %520, %v371
  %v522 = vpop.permute.xlu0 %521
  %525 = vset.pattern.permute.xlu0 0
  %526 = vperm.xlu0 %525, %v372
  %v527 = vpop.permute.xlu0 %526
  %530 = vset.pattern.permute.xlu0 0
  %531 = vperm.xlu0 %530, %v373
  %v532 = vpop.permute.xlu0 %531
  %v534 = vmul.f32 %v216, %v377
  %v535 = vmul.f32 %v219, %v382
  %v536 = vmul.f32 %v224, %v387
  %v537 = vmul.f32 %v227, %v392
  %v538 = vmul.f32 %v232, %v397
  %v539 = vmul.f32 %v235, %v402
  %v540 = vmul.f32 %v240, %v407
  %v541 = vmul.f32 %v243, %v412
  %v542 = vmul.f32 %v248, %v417
  %v543 = vmul.f32 %v251, %v422
  %v544 = vmul.f32 %v256, %v427
  %v545 = vmul.f32 %v259, %v432
  %v546 = vmul.f32 %v264, %v437
  %v547 = vmul.f32 %v267, %v442
  %v548 = vmul.f32 %v272, %v447
  %v549 = vmul.f32 %v275, %v452
  %v550 = vmul.f32 %v280, %v457
  %v551 = vmul.f32 %v283, %v462
  %v552 = vmul.f32 %v288, %v467
  %v553 = vmul.f32 %v291, %v472
  %v554 = vmul.f32 %v296, %v477
  %v555 = vmul.f32 %v299, %v482
  %v556 = vmul.f32 %v304, %v487
  %v557 = vmul.f32 %v307, %v492
  %v558 = vmul.f32 %v312, %v497
  %v559 = vmul.f32 %v315, %v502
  %v560 = vmul.f32 %v320, %v507
  %v561 = vmul.f32 %v323, %v512
  %v562 = vmul.f32 %v328, %v517
  %v563 = vmul.f32 %v331, %v522
  %v564 = vmul.f32 %v336, %v527
  %v565 = vmul.f32 %v339, %v532
  %v566 = vpack.c.bf16 %v535, %v534
  %v567 = vpack.c.bf16 %v537, %v536
  %v568 = vpack.c.bf16 %v539, %v538
  %v569 = vpack.c.bf16 %v541, %v540
  %v570 = vpack.c.bf16 %v543, %v542
  %v571 = vpack.c.bf16 %v545, %v544
  %v572 = vpack.c.bf16 %v547, %v546
  %v573 = vpack.c.bf16 %v549, %v548
  %v574 = vpack.c.bf16 %v551, %v550
  %v575 = vpack.c.bf16 %v553, %v552
  %v576 = vpack.c.bf16 %v555, %v554
  %v577 = vpack.c.bf16 %v557, %v556
  %v578 = vpack.c.bf16 %v559, %v558
  %v579 = vpack.c.bf16 %v561, %v560
  %v580 = vpack.c.bf16 %v563, %v562
  %v581 = vpack.c.bf16 %v565, %v564
  %v598 = vunpack.c.l.b16 %v566
  %v599 = vunpack.c.h.b16 %v566
  %v600 = vunpack.c.l.b16 %v567
  %v601 = vunpack.c.h.b16 %v567
  %v602 = vunpack.c.l.b16 %v568
  %v603 = vunpack.c.h.b16 %v568
  %v604 = vunpack.c.l.b16 %v569
  %v605 = vunpack.c.h.b16 %v569
  %v606 = vunpack.c.l.b16 %v570
  %v607 = vunpack.c.h.b16 %v570
  %v608 = vunpack.c.l.b16 %v571
  %v609 = vunpack.c.h.b16 %v571
  %v610 = vunpack.c.l.b16 %v572
  %v611 = vunpack.c.h.b16 %v572
  %v612 = vunpack.c.l.b16 %v573
  %v613 = vunpack.c.h.b16 %v573
  %v614 = vunpack.c.l.b16 %v574
  %v615 = vunpack.c.h.b16 %v574
  %v616 = vunpack.c.l.b16 %v575
  %v617 = vunpack.c.h.b16 %v575
  %v618 = vunpack.c.l.b16 %v576
  %v619 = vunpack.c.h.b16 %v576
  %v620 = vunpack.c.l.b16 %v577
  %v621 = vunpack.c.h.b16 %v577
  %v622 = vunpack.c.l.b16 %v578
  %v623 = vunpack.c.h.b16 %v578
  %v624 = vunpack.c.l.b16 %v579
  %v625 = vunpack.c.h.b16 %v579
  %v626 = vunpack.c.l.b16 %v580
  %v627 = vunpack.c.h.b16 %v580
  %v628 = vunpack.c.l.b16 %v581
  %v629 = vunpack.c.h.b16 %v581
  %v630 = vpack.c.b16 %v598, %v598
  %v631 = vpack.c.b16 %v599, %v599
  %v632 = vpack.c.b16 %v600, %v600
  %v633 = vpack.c.b16 %v601, %v601
  %v634 = vpack.c.b16 %v602, %v602
  %v635 = vpack.c.b16 %v603, %v603
  %v636 = vpack.c.b16 %v604, %v604
  %v637 = vpack.c.b16 %v605, %v605
  %v638 = vpack.c.b16 %v606, %v606
  %v639 = vpack.c.b16 %v607, %v607
  %v640 = vpack.c.b16 %v608, %v608
  %v641 = vpack.c.b16 %v609, %v609
  %v642 = vpack.c.b16 %v610, %v610
  %v643 = vpack.c.b16 %v611, %v611
  %v644 = vpack.c.b16 %v612, %v612
  %v645 = vpack.c.b16 %v613, %v613
  %v646 = vpack.c.b16 %v614, %v614
  %v647 = vpack.c.b16 %v615, %v615
  %v648 = vpack.c.b16 %v616, %v616
  %v649 = vpack.c.b16 %v617, %v617
  %v650 = vpack.c.b16 %v618, %v618
  %v651 = vpack.c.b16 %v619, %v619
  %v652 = vpack.c.b16 %v620, %v620
  %v653 = vpack.c.b16 %v621, %v621
  %v654 = vpack.c.b16 %v622, %v622
  %v655 = vpack.c.b16 %v623, %v623
  %v656 = vpack.c.b16 %v624, %v624
  %v657 = vpack.c.b16 %v625, %v625
  %v658 = vpack.c.b16 %v626, %v626
  %v659 = vpack.c.b16 %v627, %v627
  %v660 = vpack.c.b16 %v628, %v628
  %v661 = vpack.c.b16 %v629, %v629
  %vm694 = vcmask 125952
  %695 = vst.msk [vmem:[%s3] sm:$0xf] %vm694, %v630
  %696 = vst.msk [vmem:[%s3 + $0x4] sm:$0xf] %vm694, %v631
  %697 = vst.msk [vmem:[%s3 + $0x8] sm:$0xf] %vm694, %v632
  %698 = vst.msk [vmem:[%s3 + $0xc] sm:$0xf] %vm694, %v633
  %699 = vst.msk [vmem:[%s3 + $0x10] sm:$0xf] %vm694, %v634
  %700 = vst.msk [vmem:[%s3 + $0x14] sm:$0xf] %vm694, %v635
  %701 = vst.msk [vmem:[%s3 + $0x18] sm:$0xf] %vm694, %v636
  %702 = vst.msk [vmem:[%s3 + $0x1c] sm:$0xf] %vm694, %v637
  %703 = vst.msk [vmem:[%s3 + $0x20] sm:$0xf] %vm694, %v638
  %704 = vst.msk [vmem:[%s3 + $0x24] sm:$0xf] %vm694, %v639
  %705 = vst.msk [vmem:[%s3 + $0x28] sm:$0xf] %vm694, %v640
  %706 = vst.msk [vmem:[%s3 + $0x2c] sm:$0xf] %vm694, %v641
  %707 = vst.msk [vmem:[%s3 + $0x30] sm:$0xf] %vm694, %v642
  %708 = vst.msk [vmem:[%s3 + $0x34] sm:$0xf] %vm694, %v643
  %709 = vst.msk [vmem:[%s3 + $0x38] sm:$0xf] %vm694, %v644
  %710 = vst.msk [vmem:[%s3 + $0x3c] sm:$0xf] %vm694, %v645
  %711 = vst.msk [vmem:[%s3 + $0x40] sm:$0xf] %vm694, %v646
  %712 = vst.msk [vmem:[%s3 + $0x44] sm:$0xf] %vm694, %v647
  %713 = vst.msk [vmem:[%s3 + $0x48] sm:$0xf] %vm694, %v648
  %714 = vst.msk [vmem:[%s3 + $0x4c] sm:$0xf] %vm694, %v649
  %715 = vst.msk [vmem:[%s3 + $0x50] sm:$0xf] %vm694, %v650
  %716 = vst.msk [vmem:[%s3 + $0x54] sm:$0xf] %vm694, %v651
  %717 = vst.msk [vmem:[%s3 + $0x58] sm:$0xf] %vm694, %v652
  %718 = vst.msk [vmem:[%s3 + $0x5c] sm:$0xf] %vm694, %v653
  %719 = vst.msk [vmem:[%s3 + $0x60] sm:$0xf] %vm694, %v654
  %720 = vst.msk [vmem:[%s3 + $0x64] sm:$0xf] %vm694, %v655
  %721 = vst.msk [vmem:[%s3 + $0x68] sm:$0xf] %vm694, %v656
  %722 = vst.msk [vmem:[%s3 + $0x6c] sm:$0xf] %vm694, %v657
  %723 = vst.msk [vmem:[%s3 + $0x70] sm:$0xf] %vm694, %v658
  %724 = vst.msk [vmem:[%s3 + $0x74] sm:$0xf] %vm694, %v659
  %725 = vst.msk [vmem:[%s3 + $0x78] sm:$0xf] %vm694, %v660
  %726 = vst.msk [vmem:[%s3 + $0x7c] sm:$0xf] %vm694, %v661
  // Predicated region
  $region14: #{pyg_gcn_forward.2} parent=0 // pred_check
    _
  $region15: #{pyg_gcn_forward.2} parent=0 // pred_check_branch
    %728 = sbr.rel (0) target = $region17
  $region16: #{pyg_gcn_forward.2} parent=0 // pred_region
    _
  $region17: #{pyg_gcn_forward.2} parent=0 // pred_fallthru
    _
  // Predicated region
  $region18: #{pyg_gcn_forward.2} parent=0 // pred_check
    _
  $region19: #{pyg_gcn_forward.2} parent=0 // pred_check_branch
    %730 = sbr.rel (0) target = $region21
  $region20: #{pyg_gcn_forward.2} parent=0 // pred_region
    _
  $region21: #{pyg_gcn_forward.2} parent=0 // pred_fallthru
    _

// kernel: pyg_gcn_forward.3
$region0: #{pyg_gcn_forward.3}
  #allocation0 [shape = 'u32[]', space=smem, size = 0x4, offset = 0x4, fixed_abs, tag = 'smem constant byte address 0x4 - core index']
  #allocation1 [shape = 'u32[144,128]{1,0:T(1,128)}', space=vmem, size = 0x12000, scoped, tag = 'internal scratch']
  #allocation2 [shape = 'f32[128,128]{1,0:T(8,128)}', space=vmem, size = 0x10000, scoped, tag = 'scratch operand']
  %s0 = inlined_call_operand.vmem [shape: bf16[128,128], index: 0, kind: input, shape index: {}]
  %s1 = inlined_call_operand.vmem [shape: bf16[128,128], index: 1, kind: input, shape index: {}]
  %s2 = inlined_call_operand.vmem [shape: f32[128,1], index: 2, kind: input, shape index: {}]
  %s3 = inlined_call_operand.vmem [shape: f32[1,128], index: 3, kind: input, shape index: {}]
  %s4 = inlined_call_operand.vmem [shape: f32[128,128], index: 4, kind: output, shape index: {}]
  %s5 = sld [smem:[#allocation0]]
  $region34: #{pyg_gcn_forward.3} parent=0
    _
  %s7 = ssub.s32 1, %s5
  %s8 = scalar_select 0, %s7, %s5
  // Predicated region
  $region2: #{pyg_gcn_forward.3} parent=0 // pred_check
    _
  $region3: #{pyg_gcn_forward.3} parent=0 // pred_check_branch
    %10 = sbr.rel (0) target = $region5
  $region4: #{pyg_gcn_forward.3} parent=0 // pred_region
    _
  $region5: #{pyg_gcn_forward.3} parent=0 // pred_fallthru
    _
  // Predicated region
  $region6: #{pyg_gcn_forward.3} parent=0 // pred_check
    _
  $region7: #{pyg_gcn_forward.3} parent=0 // pred_check_branch
    %12 = sbr.rel (0) target = $region9
  $region8: #{pyg_gcn_forward.3} parent=0 // pred_region
    _
  $region9: #{pyg_gcn_forward.3} parent=0 // pred_fallthru
    _
  // Predicated region
  $region10: #{pyg_gcn_forward.3} parent=0 // pred_check
    _
  $region11: #{pyg_gcn_forward.3} parent=0 // pred_check_branch
    %14 = sbr.rel (0) target = $region13
  $region12: #{pyg_gcn_forward.3} parent=0 // pred_region
    _
  $region13: #{pyg_gcn_forward.3} parent=0 // pred_fallthru
    _
  // Predicated region
  $region14: #{pyg_gcn_forward.3} parent=0 // pred_check
    _
  $region15: #{pyg_gcn_forward.3} parent=0 // pred_check_branch
    %16 = sbr.rel (0) target = $region17
  $region16: #{pyg_gcn_forward.3} parent=0 // pred_region
    _
  $region17: #{pyg_gcn_forward.3} parent=0 // pred_fallthru
    _
  %p18 = scmp.eq.s32.totalorder 0, 0
  // Predicated region
  $region18: #{pyg_gcn_forward.3} parent=0 // pred_check
    %p19 = pneg %p18
  $region19: #{pyg_gcn_forward.3} parent=0 // pred_check_branch
    %21 = sbr.rel (%p19) target = $region21
  $region20: #{pyg_gcn_forward.3} parent=0 // pred_region
    %22 = vst [vmem:[#allocation2] sm:$0xff] 0.0
    %23 = vst [vmem:[#allocation2 + $0x8] sm:$0xff] 0.0
    %24 = vst [vmem:[#allocation2 + $0x10] sm:$0xff] 0.0
    %25 = vst [vmem:[#allocation2 + $0x18] sm:$0xff] 0.0
    %26 = vst [vmem:[#allocation2 + $0x20] sm:$0xff] 0.0
    %27 = vst [vmem:[#allocation2 + $0x28] sm:$0xff] 0.0
    %28 = vst [vmem:[#allocation2 + $0x30] sm:$0xff] 0.0
    %29 = vst [vmem:[#allocation2 + $0x38] sm:$0xff] 0.0
    %30 = vst [vmem:[#allocation2 + $0x40] sm:$0xff] 0.0
    %31 = vst [vmem:[#allocation2 + $0x48] sm:$0xff] 0.0
    %32 = vst [vmem:[#allocation2 + $0x50] sm:$0xff] 0.0
    %33 = vst [vmem:[#allocation2 + $0x58] sm:$0xff] 0.0
    %34 = vst [vmem:[#allocation2 + $0x60] sm:$0xff] 0.0
    %35 = vst [vmem:[#allocation2 + $0x68] sm:$0xff] 0.0
    %36 = vst [vmem:[#allocation2 + $0x70] sm:$0xff] 0.0
    %37 = vst [vmem:[#allocation2 + $0x78] sm:$0xff] 0.0
  $region21: #{pyg_gcn_forward.3} parent=0 // pred_fallthru
    _
  %v38 = vld [vmem:[#allocation2] sm:$0xff]
  %v39 = vld [vmem:[#allocation2 + $0x8] sm:$0xff]
  %v40 = vld [vmem:[#allocation2 + $0x10] sm:$0xff]
  %v41 = vld [vmem:[#allocation2 + $0x18] sm:$0xff]
  %v42 = vld [vmem:[#allocation2 + $0x20] sm:$0xff]
  %v43 = vld [vmem:[#allocation2 + $0x28] sm:$0xff]
  %v44 = vld [vmem:[#allocation2 + $0x30] sm:$0xff]
  %v45 = vld [vmem:[#allocation2 + $0x38] sm:$0xff]
  %v46 = vld [vmem:[#allocation2 + $0x40] sm:$0xff]
  %v47 = vld [vmem:[#allocation2 + $0x48] sm:$0xff]
  %v48 = vld [vmem:[#allocation2 + $0x50] sm:$0xff]
  %v49 = vld [vmem:[#allocation2 + $0x58] sm:$0xff]
  %v50 = vld [vmem:[#allocation2 + $0x60] sm:$0xff]
  %v51 = vld [vmem:[#allocation2 + $0x68] sm:$0xff]
  %v52 = vld [vmem:[#allocation2 + $0x70] sm:$0xff]
  %v53 = vld [vmem:[#allocation2 + $0x78] sm:$0xff]
  %v54 = vld [vmem:[%s0] sm:$0xf]
  %v55 = vld [vmem:[%s0 + $0x4] sm:$0xf]
  %v56 = vld [vmem:[%s0 + $0x8] sm:$0xf]
  %v57 = vld [vmem:[%s0 + $0xc] sm:$0xf]
  %v58 = vld [vmem:[%s0 + $0x10] sm:$0xf]
  %v59 = vld [vmem:[%s0 + $0x14] sm:$0xf]
  %v60 = vld [vmem:[%s0 + $0x18] sm:$0xf]
  %v61 = vld [vmem:[%s0 + $0x1c] sm:$0xf]
  %v62 = vld [vmem:[%s0 + $0x20] sm:$0xf]
  %v63 = vld [vmem:[%s0 + $0x24] sm:$0xf]
  %v64 = vld [vmem:[%s0 + $0x28] sm:$0xf]
  %v65 = vld [vmem:[%s0 + $0x2c] sm:$0xf]
  %v66 = vld [vmem:[%s0 + $0x30] sm:$0xf]
  %v67 = vld [vmem:[%s0 + $0x34] sm:$0xf]
  %v68 = vld [vmem:[%s0 + $0x38] sm:$0xf]
  %v69 = vld [vmem:[%s0 + $0x3c] sm:$0xf]
  %v70 = vld [vmem:[%s1] sm:$0xf]
  %v71 = vld [vmem:[%s1 + $0x4] sm:$0xf]
  %v72 = vld [vmem:[%s1 + $0x8] sm:$0xf]
  %v73 = vld [vmem:[%s1 + $0xc] sm:$0xf]
  %v74 = vld [vmem:[%s1 + $0x10] sm:$0xf]
  %v75 = vld [vmem:[%s1 + $0x14] sm:$0xf]
  %v76 = vld [vmem:[%s1 + $0x18] sm:$0xf]
  %v77 = vld [vmem:[%s1 + $0x1c] sm:$0xf]
  %v78 = vld [vmem:[%s1 + $0x20] sm:$0xf]
  %v79 = vld [vmem:[%s1 + $0x24] sm:$0xf]
  %v80 = vld [vmem:[%s1 + $0x28] sm:$0xf]
  %v81 = vld [vmem:[%s1 + $0x2c] sm:$0xf]
  %v82 = vld [vmem:[%s1 + $0x30] sm:$0xf]
  %v83 = vld [vmem:[%s1 + $0x34] sm:$0xf]
  %v84 = vld [vmem:[%s1 + $0x38] sm:$0xf]
  %v85 = vld [vmem:[%s1 + $0x3c] sm:$0xf]
  %v102 = vunpack.c.l.b16 %v54
  %v103 = vunpack.c.l.b16 %v55
  %v104 = vunpack.c.l.b16 %v56
  %v105 = vunpack.c.l.b16 %v57
  %v106 = vunpack.c.l.b16 %v58
  %v107 = vunpack.c.l.b16 %v59
  %v108 = vunpack.c.l.b16 %v60
  %v109 = vunpack.c.l.b16 %v61
  %v110 = vunpack.c.l.b16 %v62
  %v111 = vunpack.c.l.b16 %v63
  %v112 = vunpack.c.l.b16 %v64
  %v113 = vunpack.c.l.b16 %v65
  %v114 = vunpack.c.l.b16 %v66
  %v115 = vunpack.c.l.b16 %v67
  %v116 = vunpack.c.l.b16 %v68
  %v117 = vunpack.c.l.b16 %v69
  %v118 = vpack.c.b16 %v103, %v102
  %v119 = vpack.c.b16 %v105, %v104
  %v120 = vpack.c.b16 %v107, %v106
  %v121 = vpack.c.b16 %v109, %v108
  %v122 = vpack.c.b16 %v111, %v110
  %v123 = vpack.c.b16 %v113, %v112
  %v124 = vpack.c.b16 %v115, %v114
  %v125 = vpack.c.b16 %v117, %v116
  %v150 = vunpack.c.l.b16 %v70
  %v151 = vunpack.c.l.b16 %v71
  %v152 = vunpack.c.l.b16 %v72
  %v153 = vunpack.c.l.b16 %v73
  %v154 = vunpack.c.l.b16 %v74
  %v155 = vunpack.c.l.b16 %v75
  %v156 = vunpack.c.l.b16 %v76
  %v157 = vunpack.c.l.b16 %v77
  %v158 = vunpack.c.l.b16 %v78
  %v159 = vunpack.c.l.b16 %v79
  %v160 = vunpack.c.l.b16 %v80
  %v161 = vunpack.c.l.b16 %v81
  %v162 = vunpack.c.l.b16 %v82
  %v163 = vunpack.c.l.b16 %v83
  %v164 = vunpack.c.l.b16 %v84
  %v165 = vunpack.c.l.b16 %v85
  %v166 = vpack.c.b16 %v151, %v150
  %v167 = vpack.c.b16 %v153, %v152
  %v168 = vpack.c.b16 %v155, %v154
  %v169 = vpack.c.b16 %v157, %v156
  %v170 = vpack.c.b16 %v159, %v158
  %v171 = vpack.c.b16 %v161, %v160
  %v172 = vpack.c.b16 %v163, %v162
  %v173 = vpack.c.b16 %v165, %v164
  %182 = vmatprep.subr.bf16.mxu0 0
  %183 = vmatpush1.bf16.msra.mxu0 %v166
  %184 = vmatprep.subr.bf16.mxu0 0
  %185 = vmatpush1.bf16.msra.mxu0 %v167
  %186 = vmatprep.subr.bf16.mxu0 0
  %187 = vmatpush1.bf16.msra.mxu0 %v168
  %188 = vmatprep.subr.bf16.mxu0 0
  %189 = vmatpush1.bf16.msra.mxu0 %v169
  %190 = vmatprep.subr.bf16.mxu0 0
  %191 = vmatpush1.bf16.msra.mxu0 %v170
  %192 = vmatprep.subr.bf16.mxu0 0
  %193 = vmatpush1.bf16.msra.mxu0 %v171
  %194 = vmatprep.subr.bf16.mxu0 0
  %195 = vmatpush1.bf16.msra.mxu0 %v172
  %196 = vmatprep.subr.bf16.mxu0 0
  %197 = vmatpush1.bf16.msra.mxu0 %v173
  %198 = vmatprep.subr.bf16.mxu0 0
  %199 = vmatpush1.bf16.msra.mxu0 0
  %200 = vmatprep.subr.bf16.mxu0 0
  %201 = vmatpush1.bf16.msra.mxu0 0
  %202 = vmatprep.subr.bf16.mxu0 0
  %203 = vmatpush1.bf16.msra.mxu0 0
  %204 = vmatprep.subr.bf16.mxu0 0
  %205 = vmatpush1.bf16.msra.mxu0 0
  %206 = vmatprep.subr.bf16.mxu0 0
  %207 = vmatpush1.bf16.msra.mxu0 0
  %208 = vmatprep.subr.bf16.mxu0 0
  %209 = vmatpush1.bf16.msra.mxu0 0
  %210 = vmatprep.subr.bf16.mxu0 0
  %211 = vmatpush1.bf16.msra.mxu0 0
  %212 = vmatprep.subr.bf16.mxu0 0
  %213 = vmatpush1.bf16.msra.mxu0 0
  %214 = vmatprep.mubr.bf16.mxu0 0
  %215 = vmatmul.mubr.bf16.gmra.mrb[0].mxu0 %v118
  %v216 = vpop.f32.mrb[0].mxu0
  %v217 = vadd.f32 0.0, %v216
  %v218 = vpop.f32.mrb[0].mxu0
  %v219 = vpop.f32.mrb[0].mxu0
  %v220 = vadd.f32 0.0, %v219
  %v221 = vpop.f32.mrb[0].mxu0
  %222 = vmatprep.mubr.bf16.mxu0 0
  %223 = vmatmul.mubr.bf16.gmra.mrb[0].mxu0 %v119
  %v224 = vpop.f32.mrb[0].mxu0
  %v225 = vadd.f32 0.0, %v224
  %v226 = vpop.f32.mrb[0].mxu0
  %v227 = vpop.f32.mrb[0].mxu0
  %v228 = vadd.f32 0.0, %v227
  %v229 = vpop.f32.mrb[0].mxu0
  %230 = vmatprep.mubr.bf16.mxu0 0
  %231 = vmatmul.mubr.bf16.gmra.mrb[0].mxu0 %v120
  %v232 = vpop.f32.mrb[0].mxu0
  %v233 = vadd.f32 0.0, %v232
  %v234 = vpop.f32.mrb[0].mxu0
  %v235 = vpop.f32.mrb[0].mxu0
  %v236 = vadd.f32 0.0, %v235
  %v237 = vpop.f32.mrb[0].mxu0
  %238 = vmatprep.mubr.bf16.mxu0 0
  %239 = vmatmul.mubr.bf16.gmra.mrb[0].mxu0 %v121
  %v240 = vpop.f32.mrb[0].mxu0
  %v241 = vadd.f32 0.0, %v240
  %v242 = vpop.f32.mrb[0].mxu0
  %v243 = vpop.f32.mrb[0].mxu0
  %v244 = vadd.f32 0.0, %v243
  %v245 = vpop.f32.mrb[0].mxu0
  %246 = vmatprep.mubr.bf16.mxu0 0
  %247 = vmatmul.mubr.bf16.gmra.mrb[0].mxu0 %v122
  %v248 = vpop.f32.mrb[0].mxu0
  %v249 = vadd.f32 0.0, %v248
  %v250 = vpop.f32.mrb[0].mxu0
  %v251 = vpop.f32.mrb[0].mxu0
  %v252 = vadd.f32 0.0, %v251
  %v253 = vpop.f32.mrb[0].mxu0
  %254 = vmatprep.mubr.bf16.mxu0 0
  %255 = vmatmul.mubr.bf16.gmra.mrb[0].mxu0 %v123
  %v256 = vpop.f32.mrb[0].mxu0
  %v257 = vadd.f32 0.0, %v256
  %v258 = vpop.f32.mrb[0].mxu0
  %v259 = vpop.f32.mrb[0].mxu0
  %v260 = vadd.f32 0.0, %v259
  %v261 = vpop.f32.mrb[0].mxu0
  %262 = vmatprep.mubr.bf16.mxu0 0
  %263 = vmatmul.mubr.bf16.gmra.mrb[0].mxu0 %v124
  %v264 = vpop.f32.mrb[0].mxu0
  %v265 = vadd.f32 0.0, %v264
  %v266 = vpop.f32.mrb[0].mxu0
  %v267 = vpop.f32.mrb[0].mxu0
  %v268 = vadd.f32 0.0, %v267
  %v269 = vpop.f32.mrb[0].mxu0
  %270 = vmatprep.mubr.bf16.mxu0 0
  %271 = vmatmul.mubr.bf16.gmra.mrb[0].mxu0 %v125
  %v272 = vpop.f32.mrb[0].mxu0
  %v273 = vadd.f32 0.0, %v272
  %v274 = vpop.f32.mrb[0].mxu0
  %v275 = vpop.f32.mrb[0].mxu0
  %v276 = vadd.f32 0.0, %v275
  %v277 = vpop.f32.mrb[0].mxu0
  %278 = vdwg.mxu0
  %v279 = vadd.f32 %v38, %v217
  %v280 = vadd.f32 %v39, %v220
  %v281 = vadd.f32 %v40, %v225
  %v282 = vadd.f32 %v41, %v228
  %v283 = vadd.f32 %v42, %v233
  %v284 = vadd.f32 %v43, %v236
  %v285 = vadd.f32 %v44, %v241
  %v286 = vadd.f32 %v45, %v244
  %v287 = vadd.f32 %v46, %v249
  %v288 = vadd.f32 %v47, %v252
  %v289 = vadd.f32 %v48, %v257
  %v290 = vadd.f32 %v49, %v260
  %v291 = vadd.f32 %v50, %v265
  %v292 = vadd.f32 %v51, %v268
  %v293 = vadd.f32 %v52, %v273
  %v294 = vadd.f32 %v53, %v276
  %295 = vst [vmem:[#allocation2] sm:$0xff] %v279
  %296 = vst [vmem:[#allocation2 + $0x8] sm:$0xff] %v280
  %297 = vst [vmem:[#allocation2 + $0x10] sm:$0xff] %v281
  %298 = vst [vmem:[#allocation2 + $0x18] sm:$0xff] %v282
  %299 = vst [vmem:[#allocation2 + $0x20] sm:$0xff] %v283
  %300 = vst [vmem:[#allocation2 + $0x28] sm:$0xff] %v284
  %301 = vst [vmem:[#allocation2 + $0x30] sm:$0xff] %v285
  %302 = vst [vmem:[#allocation2 + $0x38] sm:$0xff] %v286
  %303 = vst [vmem:[#allocation2 + $0x40] sm:$0xff] %v287
  %304 = vst [vmem:[#allocation2 + $0x48] sm:$0xff] %v288
  %305 = vst [vmem:[#allocation2 + $0x50] sm:$0xff] %v289
  %306 = vst [vmem:[#allocation2 + $0x58] sm:$0xff] %v290
  %307 = vst [vmem:[#allocation2 + $0x60] sm:$0xff] %v291
  %308 = vst [vmem:[#allocation2 + $0x68] sm:$0xff] %v292
  %309 = vst [vmem:[#allocation2 + $0x70] sm:$0xff] %v293
  %310 = vst [vmem:[#allocation2 + $0x78] sm:$0xff] %v294
  // Predicated region
  $region22: #{pyg_gcn_forward.3} parent=0 // pred_check
    %p311 = pneg %p18
  $region23: #{pyg_gcn_forward.3} parent=0 // pred_check_branch
    %313 = sbr.rel (%p311) target = $region25
  $region24: #{pyg_gcn_forward.3} parent=0 // pred_region
    %v314 = vld [vmem:[#allocation2] sm:$0xff]
    %v315 = vld [vmem:[#allocation2 + $0x8] sm:$0xff]
    %v316 = vld [vmem:[#allocation2 + $0x10] sm:$0xff]
    %v317 = vld [vmem:[#allocation2 + $0x18] sm:$0xff]
    %v318 = vld [vmem:[#allocation2 + $0x20] sm:$0xff]
    %v319 = vld [vmem:[#allocation2 + $0x28] sm:$0xff]
    %v320 = vld [vmem:[#allocation2 + $0x30] sm:$0xff]
    %v321 = vld [vmem:[#allocation2 + $0x38] sm:$0xff]
    %v322 = vld [vmem:[#allocation2 + $0x40] sm:$0xff]
    %v323 = vld [vmem:[#allocation2 + $0x48] sm:$0xff]
    %v324 = vld [vmem:[#allocation2 + $0x50] sm:$0xff]
    %v325 = vld [vmem:[#allocation2 + $0x58] sm:$0xff]
    %v326 = vld [vmem:[#allocation2 + $0x60] sm:$0xff]
    %v327 = vld [vmem:[#allocation2 + $0x68] sm:$0xff]
    %v328 = vld [vmem:[#allocation2 + $0x70] sm:$0xff]
    %v329 = vld [vmem:[#allocation2 + $0x78] sm:$0xff]
    %v330 = vld [vmem:[%s2] sm:$0xff]
    %v331 = vld [vmem:[%s2 + $0x8] sm:$0xff]
    %v332 = vld [vmem:[%s2 + $0x10] sm:$0xff]
    %v333 = vld [vmem:[%s2 + $0x18] sm:$0xff]
    %v334 = vld [vmem:[%s2 + $0x20] sm:$0xff]
    %v335 = vld [vmem:[%s2 + $0x28] sm:$0xff]
    %v336 = vld [vmem:[%s2 + $0x30] sm:$0xff]
    %v337 = vld [vmem:[%s2 + $0x38] sm:$0xff]
    %v338 = vld [vmem:[%s2 + $0x40] sm:$0xff]
    %v339 = vld [vmem:[%s2 + $0x48] sm:$0xff]
    %v340 = vld [vmem:[%s2 + $0x50] sm:$0xff]
    %v341 = vld [vmem:[%s2 + $0x58] sm:$0xff]
    %v342 = vld [vmem:[%s2 + $0x60] sm:$0xff]
    %v343 = vld [vmem:[%s2 + $0x68] sm:$0xff]
    %v344 = vld [vmem:[%s2 + $0x70] sm:$0xff]
    %v345 = vld [vmem:[%s2 + $0x78] sm:$0xff]
    %347 = vset.pattern.permute.xlu0 0
    %348 = vperm.xlu0 %347, %v330
    %v349 = vpop.permute.xlu0 %348
    %352 = vset.pattern.permute.xlu0 0
    %353 = vperm.xlu0 %352, %v331
    %v354 = vpop.permute.xlu0 %353
    %357 = vset.pattern.permute.xlu0 0
    %358 = vperm.xlu0 %357, %v332
    %v359 = vpop.permute.xlu0 %358
    %362 = vset.pattern.permute.xlu0 0
    %363 = vperm.xlu0 %362, %v333
    %v364 = vpop.permute.xlu0 %363
    %367 = vset.pattern.permute.xlu0 0
    %368 = vperm.xlu0 %367, %v334
    %v369 = vpop.permute.xlu0 %368
    %372 = vset.pattern.permute.xlu0 0
    %373 = vperm.xlu0 %372, %v335
    %v374 = vpop.permute.xlu0 %373
    %377 = vset.pattern.permute.xlu0 0
    %378 = vperm.xlu0 %377, %v336
    %v379 = vpop.permute.xlu0 %378
    %382 = vset.pattern.permute.xlu0 0
    %383 = vperm.xlu0 %382, %v337
    %v384 = vpop.permute.xlu0 %383
    %387 = vset.pattern.permute.xlu0 0
    %388 = vperm.xlu0 %387, %v338
    %v389 = vpop.permute.xlu0 %388
    %392 = vset.pattern.permute.xlu0 0
    %393 = vperm.xlu0 %392, %v339
    %v394 = vpop.permute.xlu0 %393
    %397 = vset.pattern.permute.xlu0 0
    %398 = vperm.xlu0 %397, %v340
    %v399 = vpop.permute.xlu0 %398
    %402 = vset.pattern.permute.xlu0 0
    %403 = vperm.xlu0 %402, %v341
    %v404 = vpop.permute.xlu0 %403
    %407 = vset.pattern.permute.xlu0 0
    %408 = vperm.xlu0 %407, %v342
    %v409 = vpop.permute.xlu0 %408
    %412 = vset.pattern.permute.xlu0 0
    %413 = vperm.xlu0 %412, %v343
    %v414 = vpop.permute.xlu0 %413
    %417 = vset.pattern.permute.xlu0 0
    %418 = vperm.xlu0 %417, %v344
    %v419 = vpop.permute.xlu0 %418
    %422 = vset.pattern.permute.xlu0 0
    %423 = vperm.xlu0 %422, %v345
    %v424 = vpop.permute.xlu0 %423
    %v426 = vmul.f32 %v314, %v349
    %v427 = vmul.f32 %v315, %v354
    %v428 = vmul.f32 %v316, %v359
    %v429 = vmul.f32 %v317, %v364
    %v430 = vmul.f32 %v318, %v369
    %v431 = vmul.f32 %v319, %v374
    %v432 = vmul.f32 %v320, %v379
    %v433 = vmul.f32 %v321, %v384
    %v434 = vmul.f32 %v322, %v389
    %v435 = vmul.f32 %v323, %v394
    %v436 = vmul.f32 %v324, %v399
    %v437 = vmul.f32 %v325, %v404
    %v438 = vmul.f32 %v326, %v409
    %v439 = vmul.f32 %v327, %v414
    %v440 = vmul.f32 %v328, %v419
    %v441 = vmul.f32 %v329, %v424
    %v442 = vld [vmem:[%s3] sm:$0x1]
    %v444 = vlaneseq
    %v445 = vshrl.u32 %v444, 7
    %v446 = vsub.s32 0, %v445
    %v447 = vrot.slane %v442, %v446
    %v449 = vadd.f32 %v426, %v447
    %v450 = vadd.f32 %v427, %v447
    %v451 = vadd.f32 %v428, %v447
    %v452 = vadd.f32 %v429, %v447
    %v453 = vadd.f32 %v430, %v447
    %v454 = vadd.f32 %v431, %v447
    %v455 = vadd.f32 %v432, %v447
    %v456 = vadd.f32 %v433, %v447
    %v457 = vadd.f32 %v434, %v447
    %v458 = vadd.f32 %v435, %v447
    %v459 = vadd.f32 %v436, %v447
    %v460 = vadd.f32 %v437, %v447
    %v461 = vadd.f32 %v438, %v447
    %v462 = vadd.f32 %v439, %v447
    %v463 = vadd.f32 %v440, %v447
    %v464 = vadd.f32 %v441, %v447
    %465 = vst [vmem:[%s4] sm:$0xff] %v449
    %466 = vst [vmem:[%s4 + $0x8] sm:$0xff] %v450
    %467 = vst [vmem:[%s4 + $0x10] sm:$0xff] %v451
    %468 = vst [vmem:[%s4 + $0x18] sm:$0xff] %v452
    %469 = vst [vmem:[%s4 + $0x20] sm:$0xff] %v453
    %470 = vst [vmem:[%s4 + $0x28] sm:$0xff] %v454
    %471 = vst [vmem:[%s4 + $0x30] sm:$0xff] %v455
    %472 = vst [vmem:[%s4 + $0x38] sm:$0xff] %v456
    %473 = vst [vmem:[%s4 + $0x40] sm:$0xff] %v457
    %474 = vst [vmem:[%s4 + $0x48] sm:$0xff] %v458
    %475 = vst [vmem:[%s4 + $0x50] sm:$0xff] %v459
    %476 = vst [vmem:[%s4 + $0x58] sm:$0xff] %v460
    %477 = vst [vmem:[%s4 + $0x60] sm:$0xff] %v461
    %478 = vst [vmem:[%s4 + $0x68] sm:$0xff] %v462
    %479 = vst [vmem:[%s4 + $0x70] sm:$0xff] %v463
    %480 = vst [vmem:[%s4 + $0x78] sm:$0xff] %v464
  $region25: #{pyg_gcn_forward.3} parent=0 // pred_fallthru
    _
  // Predicated region
  $region26: #{pyg_gcn_forward.3} parent=0 // pred_check
    _
  $region27: #{pyg_gcn_forward.3} parent=0 // pred_check_branch
    %482 = sbr.rel (0) target = $region29
  $region28: #{pyg_gcn_forward.3} parent=0 // pred_region
    _
  $region29: #{pyg_gcn_forward.3} parent=0 // pred_fallthru
    _
  // Predicated region
  $region30: #{pyg_gcn_forward.3} parent=0 // pred_check
    _
  $region31: #{pyg_gcn_forward.3} parent=0 // pred_check_branch
    %484 = sbr.rel (0) target = $region33
  $region32: #{pyg_gcn_forward.3} parent=0 // pred_region
    _
  $region33: #{pyg_gcn_forward.3} parent=0 // pred_fallthru
    _

</llo_original>
